<compile_context>
chip_gen: v7x
topology: tpu7x:2x2x1
jax: 0.10.0
libtpu: 0.0.40
codegen_flags: <defaults>
</compile_context>

<pallas_src>
import functools

import jax
import jax.numpy as jnp
from jax.experimental import pallas as pl
from jax.experimental.pallas import tpu as pltpu


def _round_up8(v):
    return (v + 7) // 8 * 8


def _vmem_capacity_bytes():
    """Physical VMEM of the current chip; conservative 64 MiB fallback (v7x per-TC)."""
    try:
        info = pltpu.get_tpu_info()
        cap = getattr(info, "vmem_capacity_bytes", None)
        if cap:
            return int(cap)
    except Exception:
        pass
    return 64 << 20


def _auto_tiling(stream_dtype):
    """(block_rows, vmem_limit_bytes) sized from the lane-padded streaming footprint."""
    itemsize = jnp.dtype(stream_dtype).itemsize
    # Per row: (tm, feat_in) input tile + (tm, feat_out) output tile, each padded to 128
    # lanes in VMEM and double-buffered by the pipeline -> 2 tiles * 2 buffers * 128 lanes.
    padded_row_bytes = 2 * 2 * 128 * itemsize
    cap = _vmem_capacity_bytes()
    if cap <= (64 << 20):          # v7x-class: 64 MiB physical per TensorCore
        vmem_limit = 48 << 20
        stream_budget = 32 << 20
    else:                          # v5e / v6e: 128 MiB physical
        vmem_limit = 96 << 20
        stream_budget = 64 << 20
    block_rows = max(8192, (stream_budget // padded_row_bytes) // 8 * 8)
    return block_rows, vmem_limit


def _mlp_kernel(x_ref, w1_ref, w2_ref, vec_ref, o_ref, *, feat_hidd, feat_out):
    # Resident packed per-feature vectors (f32). Static, lane-0-aligned slices -> cheap.
    b1 = vec_ref[0:1, :feat_hidd]
    b2 = vec_ref[1:2, :feat_out]
    gamma = vec_ref[2:3, :feat_out]
    beta = vec_ref[3:4, :feat_out]

    # Linear 1 (+ folded global-attr contribution) + ReLU; f32 accumulation on MXU.
    h = jnp.dot(x_ref[...], w1_ref[...], preferred_element_type=jnp.float32)
    h = jnp.maximum(h + b1, 0.0)

    # Linear 2 + final ReLU (activate_final=True). Cast h to the weight streaming dtype
    # so bf16 weights keep the native bf16 MXU path (no-op for f32 weights).
    y = jnp.dot(h.astype(w2_ref.dtype), w2_ref[...], preferred_element_type=jnp.float32)
    y = jnp.maximum(y + b2, 0.0)

    # LayerNorm over features (torch defaults: eps=1e-5, biased variance), f32 stats.
    # All ops here are row-local and the final partial block's stores are masked, so any
    # garbage in padded rows (even NaN/Inf through rsqrt) never contaminates real rows.
    mean = jnp.mean(y, axis=-1, keepdims=True)
    diff = y - mean
    var = jnp.mean(diff * diff, axis=-1, keepdims=True)
    out = diff * jax.lax.rsqrt(var + 1e-5) * gamma + beta

    o_ref[...] = out.astype(o_ref.dtype)


def base_model_mlp(x, fused_params, *, block_rows=None, out_dtype=None,
                   stream_dtype=None, vmem_limit_bytes=None):
    """Linear-ReLU-Linear-ReLU-LayerNorm as one row-tiled Pallas kernel.

    `fused_params` = (w1_node, b1_eff, w2, b2, gamma, beta), with the global-attr
    contribution already folded into b1_eff.
    """
    w1, b1, w2, b2, gamma, beta = fused_params
    n, feat_in = x.shape
    feat_hidd = w1.shape[1]
    feat_out = w2.shape[1]

    if stream_dtype is None:
        stream_dtype = x.dtype           # no surprise casting when caller doesn't ask
    if out_dtype is None:
        out_dtype = stream_dtype

    auto_rows, auto_vmem = _auto_tiling(stream_dtype)
    if block_rows is None:
        block_rows = auto_rows
    if vmem_limit_bytes is None:
        vmem_limit_bytes = auto_vmem

    # Stream the matmul operands in a single explicit dtype (bf16 by default from the
    # forward wrapper: halves HBM traffic and MXU pushes; f32 accumulation in-kernel).
    x = x.astype(stream_dtype)
    w1 = w1.astype(stream_dtype)
    w2 = w2.astype(stream_dtype)

    # Pack the four tiny per-feature vectors into ONE resident f32 block: fewer in_specs,
    # fewer double-buffer allocations / DMA descriptors per step.
    width = max(feat_hidd, feat_out)

    def _pad_row(v):
        v = v.astype(jnp.float32).reshape(1, -1)
        return jnp.pad(v, ((0, 0), (0, width - v.shape[1])))

    vecs = jnp.concatenate([_pad_row(b1), _pad_row(b2), _pad_row(gamma), _pad_row(beta)],
                           axis=0)                                   # (4, width)

    # Row tiling: the largest block that fits the VMEM budget. Guarantee >= 2 grid steps
    # whenever n > 8 so the "parallel" row axis can be sharded over both v7x TensorCores.
    if n <= 8:
        tm = n
    elif n <= block_rows:
        tm = min(block_rows, _round_up8(pl.cdiv(n, 2)))
    else:
        tm = block_rows
    grid = (pl.cdiv(n, tm),)

    kernel = functools.partial(_mlp_kernel, feat_hidd=feat_hidd, feat_out=feat_out)

    return pl.pallas_call(
        kernel,
        out_shape=jax.ShapeDtypeStruct((n, feat_out), out_dtype),
        grid=grid,
        in_specs=[
            pl.BlockSpec((tm, feat_in), lambda i: (i, 0)),            # x: streams
            pl.BlockSpec((feat_in, feat_hidd), lambda i: (0, 0)),     # W1 (node part): resident
            pl.BlockSpec((feat_hidd, feat_out), lambda i: (0, 0)),    # W2: resident
            pl.BlockSpec((4, width), lambda i: (0, 0)),               # [b1_eff; b2; gamma; beta]
        ],
        out_specs=pl.BlockSpec((tm, feat_out), lambda i: (i, 0)),
        compiler_params=pltpu.CompilerParams(
            dimension_semantics=("parallel",),      # shard row blocks across TCs on v7x
            vmem_limit_bytes=vmem_limit_bytes,
        ),
    )(x, w1, w2, vecs)


def init_params(key, feat_in, feat_hidd, feat_out):
    """Deterministic synthetic parameters (shapes per make_mlp in BaseModel.__init__)."""
    k1, k2, k3, k4 = jax.random.split(key, 4)
    lim1 = 1.0 / jnp.sqrt(feat_in)
    lim2 = 1.0 / jnp.sqrt(feat_hidd)
    w1 = jax.random.uniform(k1, (feat_in, feat_hidd), jnp.float32, -lim1, lim1)
    b1 = jax.random.uniform(k2, (1, feat_hidd), jnp.float32, -lim1, lim1)
    w2 = jax.random.uniform(k3, (feat_hidd, feat_out), jnp.float32, -lim2, lim2)
    b2 = jax.random.uniform(k4, (1, feat_out), jnp.float32, -lim2, lim2)
    gamma = jnp.ones((1, feat_out), jnp.float32)    # LayerNorm weight
    beta = jnp.zeros((1, feat_out), jnp.float32)    # LayerNorm bias
    return (w1, b1, w2, b2, gamma, beta)


def base_model_forward(node_feats, global_attr, params, *, block_rows=None,
                       out_dtype=None, stream_dtype=jnp.bfloat16):
    """BaseModel.forward with a concrete collect_attrs (node-model style).

    The torch graph would cat([node_feats, broadcast(global_attr)], dim=1) and feed the
    full-width matrix to the MLP. Here the concat/broadcast is fused away: the global
    contribution global_attr @ W1_glob is a per-graph constant folded into the first bias.
    """
    # TODO(synk): collect_attrs is abstract (NotImplementedError) in BaseModel; a
    # node-model-style collect (node feats ++ broadcast global attr) is assumed here.
    w1, b1, w2, b2, gamma, beta = params
    node_dim = node_feats.shape[1]
    w1_node = w1[:node_dim]
    w1_glob = w1[node_dim:]
    # Fold done in f32 once per forward (tiny (1,H) matmul), independent of stream dtype.
    b1_eff = (global_attr.astype(jnp.float32) @ w1_glob.astype(jnp.float32)
              + b1.astype(jnp.float32))
    return base_model_mlp(node_feats, (w1_node, b1_eff, w2, b2, gamma, beta),
                          block_rows=block_rows, out_dtype=out_dtype,
                          stream_dtype=stream_dtype)


def _reference(node_feats, global_attr, params):
    w1, b1, w2, b2, gamma, beta = params
    n = node_feats.shape[0]
    x = jnp.concatenate(
        [node_feats.astype(jnp.float32),
         jnp.broadcast_to(global_attr, (n, global_attr.shape[-1])).astype(jnp.float32)],
        axis=1)
    h = jnp.maximum(x @ w1.astype(jnp.float32) + b1, 0.0)
    y = jnp.maximum(h @ w2.astype(jnp.float32) + b2, 0.0)
    mean = jnp.mean(y, axis=-1, keepdims=True)
    var = jnp.mean((y - mean) ** 2, axis=-1, keepdims=True)
    return (y - mean) / jnp.sqrt(var + 1e-5) * gamma + beta


if __name__ == "__main__":
    key = jax.random.PRNGKey(0)
    k_node, k_glob, k_param, k_node2 = jax.random.split(key, 4)

    node_dim, global_dim = 24, 8
    feat_in = node_dim + global_dim      # 32 (width after the torch concat)
    feat_hidd, feat_out = 64, 32

    params = init_params(k_param, feat_in, feat_hidd, feat_out)
    global_attr = jax.random.normal(k_glob, (1, global_dim), jnp.float32)

    # --- small-N, f32 streaming (tight tolerance); exercises the >=2-block row split ---
    n_small = 16
    node_feats = jax.random.normal(k_node, (n_small, node_dim), jnp.float32)
    out = jax.block_until_ready(
        base_model_forward(node_feats, global_attr, params, stream_dtype=jnp.float32))
    ref = _reference(node_feats, global_attr, params)
    assert out.shape == (n_small, feat_out) and out.dtype == jnp.float32
    assert jnp.allclose(out, ref, atol=2e-4, rtol=2e-4)

    # --- larger-N f32 path with forced small block_rows -> multi-step grid, uneven tail ---
    n_big = 1000
    node_feats_big = jax.random.normal(k_node2, (n_big, node_dim), jnp.float32)
    out_big = jax.block_until_ready(
        base_model_forward(node_feats_big, global_attr, params,
                           stream_dtype=jnp.float32, block_rows=256))
    ref_big = _reference(node_feats_big, global_attr, params)
    assert out_big.shape == (n_big, feat_out)
    assert jnp.allclose(out_big, ref_big, atol=2e-4, rtol=2e-4)

    # --- default path: bf16 streaming of x/W1/W2/output, auto block_rows / VMEM limit ---
    out_bf16 = jax.block_until_ready(
        base_model_forward(node_feats_big, global_attr, params))
    assert out_bf16.shape == (n_big, feat_out) and out_bf16.dtype == jnp.bfloat16
    err = jnp.mean(jnp.abs(out_bf16.astype(jnp.float32) - ref_big))
    assert bool(jnp.isfinite(err)) and float(err) < 0.05

    print("KERNEL_OK")
</pallas_src>

<mosaic_0001>
module attributes {stable_mosaic.version = 11 : i64} {
  func.func @_mlp_kernel(%arg0: i32, %arg1: memref<8x24xf32, #tpu.memory_space<vmem>>, %arg2: memref<24x64xf32, #tpu.memory_space<vmem>>, %arg3: memref<64x32xf32, #tpu.memory_space<vmem>>, %arg4: memref<4x64xf32, #tpu.memory_space<vmem>>, %arg5: memref<8x32xf32, #tpu.memory_space<vmem>>) attributes {dimension_semantics = [#tpu.dimension_semantics<parallel>], iteration_bounds = array<i64: 2>, scalar_prefetch = 0 : i64, scratch_operands = 0 : i64, tpu.core_type = #tpu.core_type<tc>, window_params = [{transform_indices = @transform_0, window_bounds = array<i64: 8, 24>}, {pipeline_mode = #tpu.pipeline_mode<synchronous>, transform_indices = @transform_1, window_bounds = array<i64: 24, 64>}, {pipeline_mode = #tpu.pipeline_mode<synchronous>, transform_indices = @transform_2, window_bounds = array<i64: 64, 32>}, {pipeline_mode = #tpu.pipeline_mode<synchronous>, transform_indices = @transform_3, window_bounds = array<i64: 4, 64>}, {transform_indices = @transform_4, window_bounds = array<i64: 8, 32>}]} {
    %c0 = arith.constant 0 : index
    %c0_0 = arith.constant 0 : index
    %0 = vector.load %arg4[%c0, %c0_0] : memref<4x64xf32, #tpu.memory_space<vmem>>, vector<1x64xf32>
    %c1 = arith.constant 1 : index
    %c0_1 = arith.constant 0 : index
    %1 = vector.load %arg4[%c1, %c0_1] : memref<4x64xf32, #tpu.memory_space<vmem>>, vector<1x32xf32>
    %c2 = arith.constant 2 : index
    %c0_2 = arith.constant 0 : index
    %2 = vector.load %arg4[%c2, %c0_2] : memref<4x64xf32, #tpu.memory_space<vmem>>, vector<1x32xf32>
    %c3 = arith.constant 3 : index
    %c0_3 = arith.constant 0 : index
    %3 = vector.load %arg4[%c3, %c0_3] : memref<4x64xf32, #tpu.memory_space<vmem>>, vector<1x32xf32>
    %c0_4 = arith.constant 0 : index
    %c0_5 = arith.constant 0 : index
    %4 = vector.load %arg1[%c0_4, %c0_5] : memref<8x24xf32, #tpu.memory_space<vmem>>, vector<8x24xf32>
    %c0_6 = arith.constant 0 : index
    %c0_7 = arith.constant 0 : index
    %5 = vector.load %arg2[%c0_6, %c0_7] : memref<24x64xf32, #tpu.memory_space<vmem>>, vector<24x64xf32>
    %cst = arith.constant dense<0.000000e+00> : vector<8x64xf32>
    %6 = tpu.matmul %4, %5, %cst {dimension_numbers = #tpu.dot_dimension_numbers<[1], [0], [0], [1], [0, 0, 1, 1], [], []>} : vector<8x24xf32>, vector<24x64xf32>, vector<8x64xf32> -> vector<8x64xf32>
    %7 = vector.broadcast %0 : vector<1x64xf32> to vector<8x64xf32>
    %8 = arith.addf %6, %7 : vector<8x64xf32>
    %cst_8 = arith.constant 0.000000e+00 : f32
    %9 = vector.broadcast %cst_8 : f32 to vector<8x64xf32>
    %10 = arith.maximumf %8, %9 : vector<8x64xf32>
    %c0_9 = arith.constant 0 : index
    %c0_10 = arith.constant 0 : index
    %11 = vector.load %arg3[%c0_9, %c0_10] : memref<64x32xf32, #tpu.memory_space<vmem>>, vector<64x32xf32>
    %cst_11 = arith.constant dense<0.000000e+00> : vector<8x32xf32>
    %12 = tpu.matmul %10, %11, %cst_11 {dimension_numbers = #tpu.dot_dimension_numbers<[1], [0], [0], [1], [0, 0, 1, 1], [], []>} : vector<8x64xf32>, vector<64x32xf32>, vector<8x32xf32> -> vector<8x32xf32>
    %13 = vector.broadcast %1 : vector<1x32xf32> to vector<8x32xf32>
    %14 = arith.addf %12, %13 : vector<8x32xf32>
    %cst_12 = arith.constant 0.000000e+00 : f32
    %15 = vector.broadcast %cst_12 : f32 to vector<8x32xf32>
    %16 = arith.maximumf %14, %15 : vector<8x32xf32>
    %cst_13 = arith.constant dense<0.000000e+00> : vector<8xf32>
    %17 = vector.multi_reduction <add>, %16, %cst_13 [1] : vector<8x32xf32> to vector<8xf32>
    %18 = vector.shape_cast %17 : vector<8xf32> to vector<8x1xf32>
    %cst_14 = arith.constant 3.200000e+01 : f32
    %19 = vector.broadcast %cst_14 : f32 to vector<8x1xf32>
    %20 = arith.divf %18, %19 : vector<8x1xf32>
    %21 = vector.broadcast %20 : vector<8x1xf32> to vector<8x32xf32>
    %22 = arith.subf %16, %21 : vector<8x32xf32>
    %23 = arith.mulf %22, %22 : vector<8x32xf32>
    %cst_15 = arith.constant dense<0.000000e+00> : vector<8xf32>
    %24 = vector.multi_reduction <add>, %23, %cst_15 [1] : vector<8x32xf32> to vector<8xf32>
    %25 = vector.shape_cast %24 : vector<8xf32> to vector<8x1xf32>
    %cst_16 = arith.constant 3.200000e+01 : f32
    %26 = vector.broadcast %cst_16 : f32 to vector<8x1xf32>
    %27 = arith.divf %25, %26 : vector<8x1xf32>
    %cst_17 = arith.constant 9.99999974E-6 : f32
    %28 = vector.broadcast %cst_17 : f32 to vector<8x1xf32>
    %29 = arith.addf %27, %28 : vector<8x1xf32>
    %30 = math.rsqrt %29 : vector<8x1xf32>
    %31 = vector.broadcast %30 : vector<8x1xf32> to vector<8x32xf32>
    %32 = arith.mulf %22, %31 : vector<8x32xf32>
    %33 = vector.broadcast %2 : vector<1x32xf32> to vector<8x32xf32>
    %34 = arith.mulf %32, %33 : vector<8x32xf32>
    %35 = vector.broadcast %3 : vector<1x32xf32> to vector<8x32xf32>
    %36 = arith.addf %34, %35 : vector<8x32xf32>
    %c0_18 = arith.constant 0 : index
    %c0_19 = arith.constant 0 : index
    %37 = vector.load %arg5[%c0_18, %c0_19] : memref<8x32xf32, #tpu.memory_space<vmem>>, vector<8x32xf32>
    tpu.vector_store %arg5[%c0_18, %c0_19], %36 {strides = array<i32>} : memref<8x32xf32, #tpu.memory_space<vmem>>, vector<8x32xf32>,
    return
  }
  func.func @transform_0(%arg0: i32) -> (i32, i32) {
    %c0_i32 = arith.constant 0 : i32
    %c0_i32_0 = arith.constant 0 : i32
    return %arg0, %c0_i32 : i32, i32
  }
  func.func @transform_1(%arg0: i32) -> (i32, i32) {
    %c0_i32 = arith.constant 0 : i32
    %c0_i32_0 = arith.constant 0 : i32
    %c0_i32_1 = arith.constant 0 : i32
    return %c0_i32, %c0_i32_0 : i32, i32
  }
  func.func @transform_2(%arg0: i32) -> (i32, i32) {
    %c0_i32 = arith.constant 0 : i32
    %c0_i32_0 = arith.constant 0 : i32
    %c0_i32_1 = arith.constant 0 : i32
    return %c0_i32, %c0_i32_0 : i32, i32
  }
  func.func @transform_3(%arg0: i32) -> (i32, i32) {
    %c0_i32 = arith.constant 0 : i32
    %c0_i32_0 = arith.constant 0 : i32
    %c0_i32_1 = arith.constant 0 : i32
    return %c0_i32, %c0_i32_0 : i32, i32
  }
  func.func @transform_4(%arg0: i32) -> (i32, i32) {
    %c0_i32 = arith.constant 0 : i32
    %c0_i32_0 = arith.constant 0 : i32
    return %arg0, %c0_i32 : i32, i32
  }
}

</mosaic_0001>

<llo_original>
// kernel: tpu_custom_call.1
$region0: #{tpu_custom_call.1}
  #allocation0 [shape = 'u32[]', space=smem, size = 0x4, offset = 0x4, fixed_abs, tag = 'smem constant byte address 0x4 - core index']
  #allocation1 [shape = 'u32[144,128]{1,0:T(1,128)}', space=vmem, size = 0x12000, scoped, tag = 'internal scratch']
  %s0 = inlined_call_operand.vmem [shape: f32[16,24], index: 0, kind: input, shape index: {}]
  %s1 = inlined_call_operand.vmem [shape: f32[24,64], index: 1, kind: input, shape index: {}]
  %s2 = inlined_call_operand.vmem [shape: f32[64,32], index: 2, kind: input, shape index: {}]
  %s3 = inlined_call_operand.vmem [shape: f32[4,64], index: 3, kind: input, shape index: {}]
  %s4 = inlined_call_operand.hbm [shape: f32[16,32], index: 4, kind: output, shape index: {}]
  %s5 = sld [smem:[#allocation0]]
  $region49: #{tpu_custom_call.1} parent=0
    _
  %s7 = ssub.s32 1, %s5
  %s8 = scalar_select 0, %s7, %s5
  $region1: #{tpu_custom_call.1} parent=0
    #allocation2 [shape = 'u8[8192]{0}', space=vmem, size = 0x2000, scoped, tag = 'output window, operand 0']
    #allocation3 [shape = 's32[2]{0}', space=sflag, size = 0x8, scoped, tag = 'scoped memory for tpu_custom_call.1']
    %9 = vsyncpa [#allocation3], 0
    %s10 = scalar_lea.sflag [#allocation3], 1
    %11 = vsyncpa %s10, 0
    loop: start=0, step=1, limit=4
    $region2: #{tpu_custom_call.1} parent=1 // loop_pre_header
      _
    $region3: #{tpu_custom_call.1} parent=1 // loop_header
      %s13 = sphi 0, %s17
      %p14 = scmp.ge.s32.totalorder %s13, 4
      %s23 = sphi 0, %s25
      %s26 = sphi 0, %s23
      %s27 = sphi 0, %s26
      %s43 = sphi 0, %s27
      %s47 = sphi 0, %s47
      %s49 = sphi 0, %s47
      %s50 = sphi 0, %s49
      %s64 = sphi 0, %s50
      %s68 = sphi 0, %s68
      %s70 = sphi 0, %s68
      %s71 = sphi 0, %s70
      %s85 = sphi 0, %s71
      %s89 = sphi 0, %s89
      %s91 = sphi 0, %s89
      %s92 = sphi 0, %s91
      %s106 = sphi 0, %s92
      %s112 = sphi 0, %s114
      %s115 = sphi 0, %s112
      %s116 = sphi 0, %s115
      %s132 = sphi 0, %s116
    $region4: #{tpu_custom_call.1} parent=1 // loop_header_branch
      %16 = sbr.rel (%p14) target = $region8
    $region5: #{tpu_custom_call.1} parent=1 // loop_body
      %s18 = ssub.s32 %s13, 1
      %s19 = ssub.s32 %s13, 2
      %s20 = sadd.s32 %s13, 1
      %s21 = ssub.s32 %s13, %s20
      %p22 = scmp.eq.s32.totalorder %s21, 0
      %s24 = sadd.s32 %s23, 1
      %s25 = scalar_select %p22, %s23, %s24
      %p28 = pneg %p22
      %p29 = scmp.eq.s32.totalorder %s13, 1
      %p30 = por %p28, %p29
      %p31 = scmp.ne.s32.totalorder %s23, %s26
      %p32 = scmp.eq.s32.totalorder %s13, 0
      %p33 = por %p31, %p32
      %p34 = scmp.ne.s32.totalorder %s23, %s26
      %p35 = scmp.eq.s32.totalorder %s18, 1
      %p36 = por %p34, %p35
      %p37 = scmp.ne.s32.totalorder %s26, %s27
      %p38 = scmp.eq.s32.totalorder %s18, 0
      %p39 = por %p37, %p38
      %p40 = scmp.ne.s32.totalorder %s26, %s27
      %p41 = scmp.eq.s32.totalorder %s19, 1
      %p42 = por %p40, %p41
      %p44 = scmp.ne.s32.totalorder %s27, %s43
      %p45 = scmp.eq.s32.totalorder %s19, 0
      %p46 = por %p44, %p45
      %s48 = sadd.s32 %s47, 1
      %p51 = scmp.eq.s32.totalorder %s13, 1
      %p52 = scmp.ne.s32.totalorder %s47, %s49
      %p53 = scmp.eq.s32.totalorder %s13, 0
      %p54 = por %p52, %p53
      %p55 = scmp.ne.s32.totalorder %s47, %s49
      %p56 = scmp.eq.s32.totalorder %s18, 1
      %p57 = por %p55, %p56
      %p58 = scmp.ne.s32.totalorder %s49, %s50
      %p59 = scmp.eq.s32.totalorder %s18, 0
      %p60 = por %p58, %p59
      %p61 = scmp.ne.s32.totalorder %s49, %s50
      %p62 = scmp.eq.s32.totalorder %s19, 1
      %p63 = por %p61, %p62
      %p65 = scmp.ne.s32.totalorder %s50, %s64
      %p66 = scmp.eq.s32.totalorder %s19, 0
      %p67 = por %p65, %p66
      %s69 = sadd.s32 %s68, 1
      %p72 = scmp.eq.s32.totalorder %s13, 1
      %p73 = scmp.ne.s32.totalorder %s68, %s70
      %p74 = scmp.eq.s32.totalorder %s13, 0
      %p75 = por %p73, %p74
      %p76 = scmp.ne.s32.totalorder %s68, %s70
      %p77 = scmp.eq.s32.totalorder %s18, 1
      %p78 = por %p76, %p77
      %p79 = scmp.ne.s32.totalorder %s70, %s71
      %p80 = scmp.eq.s32.totalorder %s18, 0
      %p81 = por %p79, %p80
      %p82 = scmp.ne.s32.totalorder %s70, %s71
      %p83 = scmp.eq.s32.totalorder %s19, 1
      %p84 = por %p82, %p83
      %p86 = scmp.ne.s32.totalorder %s71, %s85
      %p87 = scmp.eq.s32.totalorder %s19, 0
      %p88 = por %p86, %p87
      %s90 = sadd.s32 %s89, 1
      %p93 = scmp.eq.s32.totalorder %s13, 1
      %p94 = scmp.ne.s32.totalorder %s89, %s91
      %p95 = scmp.eq.s32.totalorder %s13, 0
      %p96 = por %p94, %p95
      %p97 = scmp.ne.s32.totalorder %s89, %s91
      %p98 = scmp.eq.s32.totalorder %s18, 1
      %p99 = por %p97, %p98
      %p100 = scmp.ne.s32.totalorder %s91, %s92
      %p101 = scmp.eq.s32.totalorder %s18, 0
      %p102 = por %p100, %p101
      %p103 = scmp.ne.s32.totalorder %s91, %s92
      %p104 = scmp.eq.s32.totalorder %s19, 1
      %p105 = por %p103, %p104
      %p107 = scmp.ne.s32.totalorder %s92, %s106
      %p108 = scmp.eq.s32.totalorder %s19, 0
      %p109 = por %p107, %p108
      %s110 = ssub.s32 %s13, %s20
      %p111 = scmp.eq.s32.totalorder %s110, 0
      %s113 = sadd.s32 %s112, 1
      %s114 = scalar_select %p111, %s112, %s113
      %p117 = pneg %p111
      %p118 = scmp.eq.s32.totalorder %s13, 1
      %p119 = por %p117, %p118
      %p120 = scmp.ne.s32.totalorder %s112, %s115
      %p121 = scmp.eq.s32.totalorder %s13, 0
      %p122 = por %p120, %p121
      %p123 = scmp.ne.s32.totalorder %s112, %s115
      %p124 = scmp.eq.s32.totalorder %s18, 1
      %p125 = por %p123, %p124
      %p126 = scmp.ne.s32.totalorder %s115, %s116
      %p127 = scmp.eq.s32.totalorder %s18, 0
      %p128 = por %p126, %p127
      %p129 = scmp.ne.s32.totalorder %s115, %s116
      %p130 = scmp.eq.s32.totalorder %s19, 1
      %p131 = por %p129, %p130
      %p133 = scmp.ne.s32.totalorder %s116, %s132
      %p134 = scmp.eq.s32.totalorder %s19, 0
      %p135 = por %p133, %p134
      %p136 = scmp.le.s32.totalorder 1, %s13
      %p137 = scmp.lt.s32.totalorder %s13, 3
      %p138 = pnand %p136, %p137
      %p139 = pneg %p138
      // Predicated region
      $region9: #{tpu_custom_call.1} parent=5 // pred_check
        _
      $region10: #{tpu_custom_call.1} parent=5 // pred_check_branch
        %141 = sbr.rel (%p138) target = $region12
      $region11: #{tpu_custom_call.1} parent=5 // pred_region
        %s142 = ssub.s32 %s13, 1
        // Predicated region
        $region13: #{tpu_custom_call.1} parent=11 // pred_check
          %p143 = pneg %p60
        $region14: #{tpu_custom_call.1} parent=11 // pred_check_branch
          %145 = sbr.rel (%p143) target = $region16
        $region15: #{tpu_custom_call.1} parent=11 // pred_region
          _
        $region16: #{tpu_custom_call.1} parent=11 // pred_fallthru
          _
        // Predicated region
        $region17: #{tpu_custom_call.1} parent=11 // pred_check
          %p146 = pneg %p81
        $region18: #{tpu_custom_call.1} parent=11 // pred_check_branch
          %148 = sbr.rel (%p146) target = $region20
        $region19: #{tpu_custom_call.1} parent=11 // pred_region
          _
        $region20: #{tpu_custom_call.1} parent=11 // pred_fallthru
          _
        // Predicated region
        $region21: #{tpu_custom_call.1} parent=11 // pred_check
          %p149 = pneg %p102
        $region22: #{tpu_custom_call.1} parent=11 // pred_check_branch
          %151 = sbr.rel (%p149) target = $region24
        $region23: #{tpu_custom_call.1} parent=11 // pred_region
          _
        $region24: #{tpu_custom_call.1} parent=11 // pred_fallthru
          _
      $region12: #{tpu_custom_call.1} parent=5 // pred_fallthru
        _
      %p152 = scmp.lt.s32.totalorder %s13, 2
      // Predicated region
      $region25: #{tpu_custom_call.1} parent=5 // pred_check
        %p153 = pneg %p152
      $region26: #{tpu_custom_call.1} parent=5 // pred_check_branch
        %155 = sbr.rel (%p153) target = $region28
      $region27: #{tpu_custom_call.1} parent=5 // pred_region
        // Predicated region
        $region29: #{tpu_custom_call.1} parent=27 // pred_check
          %p156 = pneg %p33
        $region30: #{tpu_custom_call.1} parent=27 // pred_check_branch
          %158 = sbr.rel (%p156) target = $region32
        $region31: #{tpu_custom_call.1} parent=27 // pred_region
          %p159 = scmp.lt.s32.totalorder %s13, 1
          %s160 = scalar_select %p159, %s13, 1
          %s161 = smul.addr %s160, 8
          %s162 = scalar_lea.vmem %s0, %s161
        $region32: #{tpu_custom_call.1} parent=27 // pred_fallthru
          _
      $region28: #{tpu_custom_call.1} parent=5 // pred_fallthru
        _
      %p163 = scmp.le.s32.totalorder 1, %s13
      %p164 = scmp.lt.s32.totalorder %s13, 3
      %p165 = pnand %p163, %p164
      %p166 = pneg %p165
      // Predicated region
      $region33: #{tpu_custom_call.1} parent=5 // pred_check
        _
      $region34: #{tpu_custom_call.1} parent=5 // pred_check_branch
        %168 = sbr.rel (%p165) target = $region36
      $region35: #{tpu_custom_call.1} parent=5 // pred_region
        %s169 = ssub.s32 %s13, 1
        %p170 = scmp.lt.s32.totalorder %s18, 1
        %s171 = scalar_select %p170, %s18, 1
        %s172 = smul.addr %s171, 8
        %s173 = scalar_lea.vmem %s0, %s172
        %p174 = pneg %p39
        %p175 = pneg %p36
        %p176 = pneg %p60
        %p177 = pneg %p57
        %p178 = pneg %p81
        %p179 = pneg %p78
        %p180 = pneg %p102
        %p181 = pneg %p99
        %p182 = pneg %p128
        %p183 = pneg %p125
        %s184 = sand.u32 %s115, 1
        %s185 = scalar_lea.sflag [#allocation3], %s184
        %s186 = sand.u32 %s115, 1
        %s187 = smul.addr %s186, 8
        %s188 = scalar_lea.vmem [#allocation2], %s187
        %p189 = scmp.lt.s32.totalorder %s18, 1
        %s190 = scalar_select %p189, %s18, 1
        %s191 = smul.addr %s190, 8
        %s192 = scalar_lea.vmem %s0, %s191
        %v193 = vld [vmem:[%s3] sm:$0x1]
        %v194 = vld [vmem:[%s3 + $0x1] sm:$0x1]
        %v195 = vld [vmem:[%s3 + $0x2] sm:$0x1]
        %v196 = vld [vmem:[%s3 + $0x3] sm:$0x1]
        %v197 = vld [vmem:[%s192] sm:$0xff]
        %v198 = vld [vmem:[%s1] sm:$0xff]
        %v199 = vld [vmem:[%s1 + $0x8] sm:$0xff]
        %v200 = vld [vmem:[%s1 + $0x10] sm:$0xff]
        %v201 = vlaneseq
        %v202 = vshrl.u32 %v201, 7
        %v203 = vsub.s32 0, %v202
        %v204 = vrot.slane %v193, %v203
        %vm205 = vcmask 195584
        %v207 = vsel %vm205, %v197, 0
        %209 = vmatprep.subr.mxu0 0.0
        %210 = vmatpush1.msra.mxu0 %v198
        %211 = vmatprep.subr.mxu0 0.0
        %212 = vmatpush1.msra.mxu0 %v199
        %213 = vmatprep.subr.mxu0 0.0
        %214 = vmatpush1.msra.mxu0 %v200
        %215 = vmatprep.subr.mxu0 0.0
        %216 = vmatpush1.msra.mxu0 0.0
        %217 = vmatprep.subr.mxu0 0.0
        %218 = vmatpush1.msra.mxu0 0.0
        %219 = vmatprep.subr.mxu0 0.0
        %220 = vmatpush1.msra.mxu0 0.0
        %221 = vmatprep.subr.mxu0 0.0
        %222 = vmatpush1.msra.mxu0 0.0
        %223 = vmatprep.subr.mxu0 0.0
        %224 = vmatpush1.msra.mxu0 0.0
        %225 = vmatprep.subr.mxu0 0.0
        %226 = vmatpush1.msra.mxu0 0.0
        %227 = vmatprep.subr.mxu0 0.0
        %228 = vmatpush1.msra.mxu0 0.0
        %229 = vmatprep.subr.mxu0 0.0
        %230 = vmatpush1.msra.mxu0 0.0
        %231 = vmatprep.subr.mxu0 0.0
        %232 = vmatpush1.msra.mxu0 0.0
        %233 = vmatprep.subr.mxu0 0.0
        %234 = vmatpush1.msra.mxu0 0.0
        %235 = vmatprep.subr.mxu0 0.0
        %236 = vmatpush1.msra.mxu0 0.0
        %237 = vmatprep.subr.mxu0 0.0
        %238 = vmatpush1.msra.mxu0 0.0
        %239 = vmatprep.subr.mxu0 0.0
        %240 = vmatpush1.msra.mxu0 0.0
        %241 = vmatprep.subr.mxu0 0.0
        %242 = vmatpush1.msra.mxu0 0.0
        %243 = vmatprep.subr.mxu0 0.0
        %244 = vmatpush1.msra.mxu0 0.0
        %245 = vmatprep.subr.mxu0 0.0
        %246 = vmatpush1.msra.mxu0 0.0
        %247 = vmatprep.subr.mxu0 0.0
        %248 = vmatpush1.msra.mxu0 0.0
        %249 = vmatprep.subr.mxu0 0.0
        %250 = vmatpush1.msra.mxu0 0.0
        %251 = vmatprep.subr.mxu0 0.0
        %252 = vmatpush1.msra.mxu0 0.0
        %253 = vmatprep.subr.mxu0 0.0
        %254 = vmatpush1.msra.mxu0 0.0
        %255 = vmatprep.subr.mxu0 0.0
        %256 = vmatpush1.msra.mxu0 0.0
        %257 = vmatprep.subr.mxu0 0.0
        %258 = vmatpush1.msra.mxu0 0.0
        %259 = vmatprep.subr.mxu0 0.0
        %260 = vmatpush1.msra.mxu0 0.0
        %261 = vmatprep.subr.mxu0 0.0
        %262 = vmatpush1.msra.mxu0 0.0
        %263 = vmatprep.subr.mxu0 0.0
        %264 = vmatpush1.msra.mxu0 0.0
        %265 = vmatprep.subr.mxu0 0.0
        %266 = vmatpush1.msra.mxu0 0.0
        %267 = vmatprep.subr.mxu0 0.0
        %268 = vmatpush1.msra.mxu0 0.0
        %269 = vmatprep.subr.mxu0 0.0
        %270 = vmatpush1.msra.mxu0 0.0
        %271 = vmatprep.subr.mxu0 0.0
        %272 = vmatpush1.msra.mxu0 0.0
        %273 = vmatprep.mubr.f32.mxu0 0.0
        %274 = vmatmul.mubr.f32.gmra.mrb[0].mxu0 %v207
        %v275 = vpop.f32.mrb[0].mxu0
        %v276 = vadd.f32 %v204, %v275
        %v277 = vpop.f32.mrb[0].mxu0
        %278 = vdwg.mxu0
        %v279 = vmax.f32 %v276, 0.0
        %v280 = vld [vmem:[%s2] sm:$0xff]
        %v281 = vld [vmem:[%s2 + $0x8] sm:$0xff]
        %v282 = vld [vmem:[%s2 + $0x10] sm:$0xff]
        %v283 = vld [vmem:[%s2 + $0x18] sm:$0xff]
        %v284 = vld [vmem:[%s2 + $0x20] sm:$0xff]
        %v285 = vld [vmem:[%s2 + $0x28] sm:$0xff]
        %v286 = vld [vmem:[%s2 + $0x30] sm:$0xff]
        %v287 = vld [vmem:[%s2 + $0x38] sm:$0xff]
        %v288 = vlaneseq
        %v289 = vshrl.u32 %v288, 7
        %v290 = vsub.s32 0, %v289
        %v291 = vrot.slane %v194, %v290
        %vm292 = vcmask 523264
        %v294 = vsel %vm292, %v279, 0
        %296 = vmatprep.subr.mxu0 0.0
        %297 = vmatpush1.msra.mxu0 %v280
        %298 = vmatprep.subr.mxu0 0.0
        %299 = vmatpush1.msra.mxu0 %v281
        %300 = vmatprep.subr.mxu0 0.0
        %301 = vmatpush1.msra.mxu0 %v282
        %302 = vmatprep.subr.mxu0 0.0
        %303 = vmatpush1.msra.mxu0 %v283
        %304 = vmatprep.subr.mxu0 0.0
        %305 = vmatpush1.msra.mxu0 %v284
        %306 = vmatprep.subr.mxu0 0.0
        %307 = vmatpush1.msra.mxu0 %v285
        %308 = vmatprep.subr.mxu0 0.0
        %309 = vmatpush1.msra.mxu0 %v286
        %310 = vmatprep.subr.mxu0 0.0
        %311 = vmatpush1.msra.mxu0 %v287
        %312 = vmatprep.subr.mxu0 0.0
        %313 = vmatpush1.msra.mxu0 0.0
        %314 = vmatprep.subr.mxu0 0.0
        %315 = vmatpush1.msra.mxu0 0.0
        %316 = vmatprep.subr.mxu0 0.0
        %317 = vmatpush1.msra.mxu0 0.0
        %318 = vmatprep.subr.mxu0 0.0
        %319 = vmatpush1.msra.mxu0 0.0
        %320 = vmatprep.subr.mxu0 0.0
        %321 = vmatpush1.msra.mxu0 0.0
        %322 = vmatprep.subr.mxu0 0.0
        %323 = vmatpush1.msra.mxu0 0.0
        %324 = vmatprep.subr.mxu0 0.0
        %325 = vmatpush1.msra.mxu0 0.0
        %326 = vmatprep.subr.mxu0 0.0
        %327 = vmatpush1.msra.mxu0 0.0
        %328 = vmatprep.subr.mxu0 0.0
        %329 = vmatpush1.msra.mxu0 0.0
        %330 = vmatprep.subr.mxu0 0.0
        %331 = vmatpush1.msra.mxu0 0.0
        %332 = vmatprep.subr.mxu0 0.0
        %333 = vmatpush1.msra.mxu0 0.0
        %334 = vmatprep.subr.mxu0 0.0
        %335 = vmatpush1.msra.mxu0 0.0
        %336 = vmatprep.subr.mxu0 0.0
        %337 = vmatpush1.msra.mxu0 0.0
        %338 = vmatprep.subr.mxu0 0.0
        %339 = vmatpush1.msra.mxu0 0.0
        %340 = vmatprep.subr.mxu0 0.0
        %341 = vmatpush1.msra.mxu0 0.0
        %342 = vmatprep.subr.mxu0 0.0
        %343 = vmatpush1.msra.mxu0 0.0
        %344 = vmatprep.subr.mxu0 0.0
        %345 = vmatpush1.msra.mxu0 0.0
        %346 = vmatprep.subr.mxu0 0.0
        %347 = vmatpush1.msra.mxu0 0.0
        %348 = vmatprep.subr.mxu0 0.0
        %349 = vmatpush1.msra.mxu0 0.0
        %350 = vmatprep.subr.mxu0 0.0
        %351 = vmatpush1.msra.mxu0 0.0
        %352 = vmatprep.subr.mxu0 0.0
        %353 = vmatpush1.msra.mxu0 0.0
        %354 = vmatprep.subr.mxu0 0.0
        %355 = vmatpush1.msra.mxu0 0.0
        %356 = vmatprep.subr.mxu0 0.0
        %357 = vmatpush1.msra.mxu0 0.0
        %358 = vmatprep.subr.mxu0 0.0
        %359 = vmatpush1.msra.mxu0 0.0
        %360 = vmatprep.mubr.f32.mxu0 0.0
        %361 = vmatmul.mubr.f32.gmra.mrb[0].mxu0 %v294
        %v362 = vpop.f32.mrb[0].mxu0
        %v363 = vadd.f32 %v291, %v362
        %v364 = vpop.f32.mrb[0].mxu0
        %365 = vdwg.mxu0
        %v366 = vmax.f32 %v363, 0.0
        %vm367 = vcmask 261120
        %v368 = vsel %vm367, %v366, 0.0
        %369 = vadd.xlane.f32.xlu0 %v368
        %v370 = vpop.xlane.xlu0 %369
        %v371 = vrcp.pop 32.0
        %v372 = vmul.f32 %v370, %v371
        %v373 = vsub.f32 %v366, %v372
        %v374 = vmul.f32 %v373, %v373
        %v375 = vsel %vm367, %v374, 0.0
        %376 = vadd.xlane.f32.xlu0 %v375
        %v377 = vpop.xlane.xlu0 %376
        %v378 = vmul.f32 %v377, %v371
        %v379 = vadd.f32 %v378, 1e-05
        %v380 = vrsqrt.pop %v379
        %v381 = vmul.f32 %v373, %v380
        %v382 = vlaneseq
        %v383 = vshrl.u32 %v382, 7
        %v384 = vsub.s32 0, %v383
        %v385 = vrot.slane %v195, %v384
        %v386 = vmul.f32 %v381, %v385
        %v387 = vlaneseq
        %v388 = vshrl.u32 %v387, 7
        %v389 = vsub.s32 0, %v388
        %v390 = vrot.slane %v196, %v389
        %v391 = vadd.f32 %v386, %v390
        %392 = vst.msk [vmem:[%s188] sm:$0xff] %vm367, %v391
        %s393 = sand.u32 %s115, 1
        %s394 = scalar_lea.sflag [#allocation3], %s393
        %s395 = sand.u32 %s115, 1
        %s396 = smul.addr %s395, 8
        %s397 = scalar_lea.vmem [#allocation2], %s396
        // Predicated region
        $region37: #{tpu_custom_call.1} parent=35 // pred_check
          %p398 = pneg %p125
        $region38: #{tpu_custom_call.1} parent=35 // pred_check_branch
          %400 = sbr.rel (%p398) target = $region40
        $region39: #{tpu_custom_call.1} parent=35 // pred_region
          %s402 = ssub.s32 128, 128
          %403 = vsyncadd %s394, %s402
          %s404 = smul.addr %s18, 128
          %s405 = scalar_lea.hbm %s4, %s404
          %s407 = sshll.u32 %s397, 4
          %s408 = int_to_ptr.vmem [resolvable:$true] %s407
          %410 = dma.vmem_to_hbm [thread:$0]  %s408, 128, %s405, %s394
        $region40: #{tpu_custom_call.1} parent=35 // pred_fallthru
          _
      $region36: #{tpu_custom_call.1} parent=5 // pred_fallthru
        _
      %p411 = scmp.le.s32.totalorder 2, %s13
      // Predicated region
      $region41: #{tpu_custom_call.1} parent=5 // pred_check
        %p412 = pneg %p411
      $region42: #{tpu_custom_call.1} parent=5 // pred_check_branch
        %414 = sbr.rel (%p412) target = $region44
      $region43: #{tpu_custom_call.1} parent=5 // pred_region
        %s415 = ssub.s32 %s13, 2
        // Predicated region
        $region45: #{tpu_custom_call.1} parent=43 // pred_check
          %p416 = pneg %p131
        $region46: #{tpu_custom_call.1} parent=43 // pred_check_branch
          %418 = sbr.rel (%p416) target = $region48
        $region47: #{tpu_custom_call.1} parent=43 // pred_region
          %s419 = sand.u32 %s116, 1
          %s420 = scalar_lea.sflag [#allocation3], %s419
          %s421 = sand.u32 %s116, 1
          %s422 = smul.addr %s421, 8
          %s423 = scalar_lea.vmem [#allocation2], %s422
          %424 = dma.done %s420, 128
        $region48: #{tpu_custom_call.1} parent=43 // pred_fallthru
          _
      $region44: #{tpu_custom_call.1} parent=5 // pred_fallthru
        _
    $region6: #{tpu_custom_call.1} parent=1 // loop_footer
      %s17 = sadd.s32 1, %s13
    $region7: #{tpu_custom_call.1} parent=1 // loop_footer_branch
      %12 = sbr.rel target = $region3
    $region8: #{tpu_custom_call.1} parent=1 // loop_exit
      _
    %425 = vsyncpa [#allocation3], 1
    %s426 = scalar_lea.sflag [#allocation3], 1
    %427 = vsyncpa %s426, 1

</llo_original>
